<compile_context>
chip_gen: v7x
topology: tpu7x:2x2x1
jax: 0.10.0
libtpu: 0.0.40
codegen_flags: <defaults>
</compile_context>

<pallas_src>
import math

import jax
import jax.numpy as jnp
from jax import lax
from jax.experimental import pallas as pl
from jax.experimental.pallas import tpu as pltpu


def _round_up(x, m):
    return ((x + m - 1) // m) * m


def _cdiv(a, b):
    return (a + b - 1) // b


def _vmem_budget_bytes():
    """Usable per-TensorCore VMEM budget with headroom for Mosaic scratch."""
    try:
        cap = int(pltpu.get_tpu_info().vmem_capacity_bytes)
    except Exception:  # interpret mode / older runtimes
        cap = 64 * 1024 * 1024  # assume the smallest (v7x) capacity
    # ~3/4 of physical, capped at 96 MiB: 48 MiB on v7x, 96 MiB on v5e/v6e.
    return max(16 * 1024 * 1024, min(cap * 3 // 4, 96 * 1024 * 1024))


# ---------------------------------------------------------------------------
# Parameter construction (glue, plain JAX) — mirrors _gen_SDK_mapping exactly.
# ---------------------------------------------------------------------------
def _ordered_pairs_sum(x):
    return [(i, x - i) for i in range(x + 1)]


def gen_sdk_mapping(kernel, pw_height, pw_width):
    """kernel: (oc, ic, k, k) -> weight_map (P*oc, ic*pw_h*pw_w), P = positions."""
    oc, ic, k, _ = kernel.shape
    h_diff = pw_height - k
    w_diff = pw_width - k
    maps = []
    for (top, bottom) in _ordered_pairs_sum(h_diff):          # vertical shifts
        for (left, right) in _ordered_pairs_sum(w_diff):      # horizontal shifts
            padded = jnp.pad(kernel, ((0, 0), (0, 0), (top, bottom), (left, right)))
            maps.append(padded.reshape(oc, -1))
    return jnp.concatenate(maps, axis=0)


# ---------------------------------------------------------------------------
# Pallas kernels
# ---------------------------------------------------------------------------
def _matmul_kernel_noacc(x_ref, w_ref, o_ref):
    # Single contraction step per output tile: write the MXU result directly.
    # No f32 scratch / init-finalize -> no per-tile VMEM read-modify-write.
    o_ref[...] = jnp.dot(
        x_ref[...], w_ref[...], preferred_element_type=jnp.float32
    ).astype(o_ref.dtype)


def _matmul_kernel_acc(x_ref, w_ref, o_ref, acc_ref):
    @pl.when(pl.program_id(2) == 0)
    def _init():
        acc_ref[...] = jnp.zeros_like(acc_ref)

    acc_ref[...] += jnp.dot(
        x_ref[...], w_ref[...], preferred_element_type=jnp.float32
    )

    @pl.when(pl.program_id(2) == pl.num_programs(2) - 1)
    def _finalize():
        o_ref[...] = acc_ref[...].astype(o_ref.dtype)


def sdk_linear_pallas(x2d, w_t, *, out_dtype=jnp.float32, tn_max=512, tk_max=512):
    """x2d: (M, K), w_t: (K, Nout) -> (M, Nout) out_dtype (default f32).

    K and Nout are kept at their natural (unpadded) extents whenever they fit
    a single tile — full-extent blocks are legal and avoid inflating the HBM
    streams of this memory-bound kernel.  M is padded minimally to a multiple
    of the (16-aligned) row tile.
    """
    M, K = x2d.shape
    K2, Nout = w_t.shape
    assert K == K2, "contraction mismatch"

    in_bytes = x2d.dtype.itemsize
    out_bytes = jnp.dtype(out_dtype).itemsize
    budget = _vmem_budget_bytes()

    # ---- K tiling: full extent (no zero-pad of the dominant x2d tensor) when
    # K fits a single contraction step; otherwise tile in 128-multiples.
    if K <= tk_max:
        tk, Kp = K, K
    else:
        tk = tk_max
        Kp = _round_up(K, tk)
    grid_k = Kp // tk

    # ---- N tiling: Nout (=P*oc) is typically small; keep it full-extent so
    # the output is not write-inflated and the weight tile index is constant.
    if Nout <= tn_max:
        tn, Np = Nout, Nout
    else:
        tn = tn_max
        Np = _round_up(Nout, tn)
    grid_n = Np // tn

    # ---- M tiling: multiples of 16 (bf16 sublane packing), minimal padding,
    # >= 2 tiles so both v7x TensorCores get work, capped by the VMEM budget.
    per_row = 2 * tk * in_bytes + 2 * tn * out_bytes + (tn * 4 if grid_k > 1 else 0)
    fixed = 2 * tk * tn * in_bytes
    tm_cap = max((budget // 2 - fixed) // max(per_row, 1), 16)
    tm_cap = max(16, min(int(tm_cap), 1024))
    tm_cap = (tm_cap // 16) * 16

    min_m_tiles = 2 if M >= 32 else 1
    n_m_tiles = max(_cdiv(M, tm_cap), min_m_tiles)
    tm = _round_up(_cdiv(M, n_m_tiles), 16)
    Mp = _round_up(M, tm)
    grid_m = Mp // tm

    if (Mp, Kp) != (M, K):
        x2d = jnp.pad(x2d, ((0, Mp - M), (0, Kp - K)))
    if (Kp, Np) != (K, Nout):
        w_t = jnp.pad(w_t, ((0, Kp - K), (0, Np - Nout)))

    # VMEM budget: double-buffered input/output tiles (+ f32 acc if reducing).
    need = (2 * (tm * tk + tk * tn) * in_bytes
            + 2 * tm * tn * out_bytes
            + (tm * tn * 4 if grid_k > 1 else 0))
    vmem_limit = int(min(budget, max(32 * 1024 * 1024, 2 * need)))

    # Advisory cost: x is re-streamed per N tile; w is fetched once when its
    # block index is constant across the grid, else once per M tile.
    w_refetch = 1 if (grid_n == 1 and grid_k == 1) else grid_m
    cost = pl.CostEstimate(
        flops=2 * Mp * Np * Kp,
        transcendentals=0,
        bytes_accessed=(Mp * Kp * in_bytes * grid_n
                        + Kp * Np * in_bytes * w_refetch
                        + Mp * Np * out_bytes),
    )

    if grid_k == 1:
        kernel = _matmul_kernel_noacc
        grid = (grid_m, grid_n)
        in_specs = [
            pl.BlockSpec((tm, tk), lambda i, j: (i, 0)),
            pl.BlockSpec((tk, tn), lambda i, j: (0, j)),   # constant when grid_n==1
        ]
        out_specs = pl.BlockSpec((tm, tn), lambda i, j: (i, j))
        scratch_shapes = []
        dim_semantics = ("parallel", "parallel")
    else:
        kernel = _matmul_kernel_acc
        grid = (grid_m, grid_n, grid_k)                    # reduction axis last
        in_specs = [
            pl.BlockSpec((tm, tk), lambda i, j, k: (i, k)),
            pl.BlockSpec((tk, tn), lambda i, j, k: (k, j)),
        ]
        out_specs = pl.BlockSpec((tm, tn), lambda i, j, k: (i, j))
        scratch_shapes = [pltpu.VMEM((tm, tn), jnp.float32)]
        dim_semantics = ("parallel", "parallel", "arbitrary")

    out = pl.pallas_call(
        kernel,
        out_shape=jax.ShapeDtypeStruct((Mp, Np), out_dtype),
        grid_spec=pltpu.PrefetchScalarGridSpec(
            num_scalar_prefetch=0,
            grid=grid,
            in_specs=in_specs,
            out_specs=out_specs,
            scratch_shapes=scratch_shapes,
        ),
        compiler_params=pltpu.CompilerParams(
            dimension_semantics=dim_semantics,
            vmem_limit_bytes=vmem_limit,
        ),
        cost_estimate=cost,
    )(x2d, w_t)

    if (Mp, Np) != (M, Nout):
        out = out[:M, :Nout]
    return out


# ---------------------------------------------------------------------------
# Glue: unfold (im2col) + reshapes, replicating _slice_and_forward exactly.
# ---------------------------------------------------------------------------
def unfold_nchw(x, kh, kw, sh, sw):
    """torch F.unfold(x, (kh, kw), stride=(sh, sw)).transpose(1, 2) equivalent.

    Returns (N, L, C*kh*kw) with the feature dim ordered channel-slowest, then
    kernel row, then kernel column (matching F.unfold).  Built from kh*kw
    static strided slices — no XLA gather.
    """
    N, C, H, W = x.shape
    oh = (H - kh) // sh + 1
    ow = (W - kw) // sw + 1
    cols = []
    for i in range(kh):
        for j in range(kw):
            sl = lax.slice(
                x,
                (0, 0, i, j),
                (N, C, i + (oh - 1) * sh + 1, j + (ow - 1) * sw + 1),
                (1, 1, sh, sw),
            )                                   # (N, C, oh, ow)
            cols.append(sl)
    patches = jnp.stack(cols, axis=2)           # (N, C, kh*kw, oh, ow)
    patches = patches.reshape(N, C * kh * kw, oh * ow)
    return jnp.transpose(patches, (0, 2, 1))    # (N, L, C*kh*kw)


class Conv2dSDK:
    """Forward-pass port of the PyTorch Conv2dSDK module (NCHW in, NCHW out)."""

    def __init__(self, kernel, pw_width, pw_height, compute_dtype=jnp.bfloat16):
        if kernel.shape[2] != kernel.shape[3]:
            raise ValueError("Kernel is not square. Rectangular Kernel not supported.")
        if pw_height < kernel.shape[2] or pw_width < kernel.shape[3]:
            raise ValueError("Parallel window is smaller than the kernel.")
        self.kernel = kernel
        self.out_channels = kernel.shape[0]
        self.in_channels = kernel.shape[1]
        self.kernel_size = kernel.shape[2]
        self.pw_width = int(pw_width)
        self.pw_height = int(pw_height)
        # Note: inputs/weights are cast to compute_dtype (bf16 by default) on
        # the mem-bound matmul path; accumulation is always f32.
        self.compute_dtype = compute_dtype
        # Build / transpose / cast the SDK weight map once per weight.
        self.weight_map = gen_sdk_mapping(kernel, self.pw_height, self.pw_width)
        self.w_t = jnp.asarray(self.weight_map.T, dtype=compute_dtype)  # (D, P*oc)

    def __call__(self, x, use_pallas=True):
        return self._slice_and_forward(x, use_pallas=use_pallas)

    def _slice_and_forward(self, x, use_pallas=True):
        num, depth, height, width = x.shape
        k = self.kernel_size
        stride_ver = self.pw_height - k + 1
        stride_hor = self.pw_width - k + 1
        pad_ver = (height + 2 - self.pw_height) % stride_ver
        pad_hor = (width + 2 - self.pw_width) % stride_hor
        slide_ver = math.ceil((height + 2 - self.pw_height) / stride_ver) + 1
        slide_hor = math.ceil((width + 2 - self.pw_width) / stride_hor) + 1

        padded_x = jnp.pad(x, ((0, 0), (0, 0), (1, 1 + pad_ver), (1, 1 + pad_hor)))
        # TODO(synk): fuse this im2col into the Pallas kernel (manual
        # make_async_copy of row strips) to avoid materializing the
        # overlap-duplicated window tensor through HBM.
        flat_windows = unfold_nchw(
            padded_x, self.pw_height, self.pw_width, stride_ver, stride_hor
        )

        N, L, D = flat_windows.shape
        x2d = flat_windows.reshape(N * L, D).astype(self.compute_dtype)

        if use_pallas:
            lin = sdk_linear_pallas(x2d, self.w_t)
        else:
            lin = jnp.dot(x2d, self.w_t, preferred_element_type=jnp.float32)

        oc = self.out_channels
        lin = lin.reshape(num, slide_ver, slide_hor, stride_ver, stride_hor, oc)
        lin = jnp.swapaxes(lin, 2, 3)
        # Mirrors the PyTorch reference (`height + int(pad_ver / 2)`) exactly,
        # including its behavior for odd pads.
        lin = lin.reshape(num, height + pad_ver // 2, width + pad_hor // 2, oc)
        # TODO(synk): keep NHWC for the consumer (or emit NCHW directly via the
        # kernel's out index_map) to save this full-tensor HBM transpose pass.
        lin = jnp.transpose(lin, (0, 3, 1, 2))                      # NHWC -> NCHW
        return lin[:, :, :height, :width]


if __name__ == "__main__":
    key = jax.random.PRNGKey(0)
    kkey, xkey = jax.random.split(key)

    out_channels, in_channels, kernel_size = 8, 4, 3
    pw_height = pw_width = 4
    kernel = jax.random.normal(
        kkey, (out_channels, in_channels, kernel_size, kernel_size), jnp.float32
    )
    x = jax.random.normal(xkey, (2, in_channels, 16, 16), jnp.float32)

    conv = Conv2dSDK(kernel, pw_width, pw_height, compute_dtype=jnp.bfloat16)

    out = conv(x, use_pallas=True)
    out = jax.block_until_ready(out)
    assert out.shape == (2, out_channels, 16, 16), out.shape

    # Tight check: identical bf16 inputs / f32-accum path, XLA dot vs Pallas MXU.
    ref_bf16 = conv(x, use_pallas=False)
    assert jnp.allclose(out, ref_bf16, atol=1e-3, rtol=1e-3), "Pallas matmul mismatch"

    # Independent reference: at these shapes (pad_ver == pad_hor == 0) the SDK
    # pipeline reproduces an ordinary padding-1 / stride-1 convolution exactly
    # (loose tolerance covers the intentional bf16 input cast).
    ref_conv = lax.conv_general_dilated(
        x, kernel, window_strides=(1, 1), padding=((1, 1), (1, 1)),
        dimension_numbers=("NCHW", "OIHW", "NCHW"),
    )
    assert jnp.allclose(out, ref_conv, atol=0.25, rtol=5e-2), "conv reference mismatch"

    print("KERNEL_OK")
</pallas_src>

<mosaic_0001>
module attributes {stable_mosaic.version = 11 : i64} {
  func.func @_matmul_kernel_noacc(%arg0: i32, %arg1: i32, %arg2: memref<64x64xbf16, #tpu.memory_space<vmem>>, %arg3: memref<64x32xbf16, #tpu.memory_space<vmem>>, %arg4: memref<64x32xf32, #tpu.memory_space<vmem>>) attributes {dimension_semantics = [#tpu.dimension_semantics<parallel>, #tpu.dimension_semantics<parallel>], iteration_bounds = array<i64: 2, 1>, scalar_prefetch = 0 : i64, scratch_operands = 0 : i64, tpu.core_type = #tpu.core_type<tc>, window_params = [{transform_indices = @transform_0, window_bounds = array<i64: 64, 64>}, {transform_indices = @transform_1, window_bounds = array<i64: 64, 32>}, {transform_indices = @transform_2, window_bounds = array<i64: 64, 32>}]} {
    %c0 = arith.constant 0 : index
    %c0_0 = arith.constant 0 : index
    %0 = vector.load %arg2[%c0, %c0_0] : memref<64x64xbf16, #tpu.memory_space<vmem>>, vector<64x64xbf16>
    %c0_1 = arith.constant 0 : index
    %c0_2 = arith.constant 0 : index
    %1 = vector.load %arg3[%c0_1, %c0_2] : memref<64x32xbf16, #tpu.memory_space<vmem>>, vector<64x32xbf16>
    %cst = arith.constant dense<0.000000e+00> : vector<64x32xf32>
    %2 = tpu.matmul %0, %1, %cst {dimension_numbers = #tpu.dot_dimension_numbers<[1], [0], [0], [1], [0, 0, 1, 1], [], []>} : vector<64x64xbf16>, vector<64x32xbf16>, vector<64x32xf32> -> vector<64x32xf32>
    %c0_3 = arith.constant 0 : index
    %c0_4 = arith.constant 0 : index
    %3 = vector.load %arg4[%c0_3, %c0_4] : memref<64x32xf32, #tpu.memory_space<vmem>>, vector<64x32xf32>
    tpu.vector_store %arg4[%c0_3, %c0_4], %2 {strides = array<i32>} : memref<64x32xf32, #tpu.memory_space<vmem>>, vector<64x32xf32>,
    return
  }
  func.func @transform_0(%arg0: i32, %arg1: i32) -> (i32, i32) {
    %c0_i32 = arith.constant 0 : i32
    %c0_i32_0 = arith.constant 0 : i32
    return %arg0, %c0_i32 : i32, i32
  }
  func.func @transform_1(%arg0: i32, %arg1: i32) -> (i32, i32) {
    %c0_i32 = arith.constant 0 : i32
    %c0_i32_0 = arith.constant 0 : i32
    return %c0_i32, %arg1 : i32, i32
  }
  func.func @transform_2(%arg0: i32, %arg1: i32) -> (i32, i32) {
    %c0_i32 = arith.constant 0 : i32
    return %arg0, %arg1 : i32, i32
  }
}

</mosaic_0001>

<llo_original>
// kernel: tpu_custom_call.1
$region0: #{tpu_custom_call.1}
  #allocation0 [shape = 'u32[]', space=smem, size = 0x4, offset = 0x4, fixed_abs, tag = 'smem constant byte address 0x4 - core index']
  #allocation1 [shape = 'u32[144,128]{1,0:T(1,128)}', space=vmem, size = 0x12000, scoped, tag = 'internal scratch']
  %s0 = inlined_call_operand.vmem [shape: bf16[128,64], index: 0, kind: input, shape index: {}]
  %s1 = inlined_call_operand.vmem [shape: bf16[64,32], index: 1, kind: input, shape index: {}]
  %s2 = inlined_call_operand.vmem [shape: f32[128,32], index: 2, kind: output, shape index: {}]
  %s3 = sld [smem:[#allocation0]]
  $region41: #{tpu_custom_call.1} parent=0
    _
  %s5 = ssub.s32 1, %s3
  %s6 = scalar_select 0, %s5, %s3
  loop: start=0, step=1, limit=4
  $region2: #{tpu_custom_call.1} parent=0 // loop_pre_header
    _
  $region3: #{tpu_custom_call.1} parent=0 // loop_header
    %s8 = sphi 0, %s12
    %p9 = scmp.ge.s32.totalorder %s8, 4
    %s15 = sphi 0, %s27
    %s16 = sphi 0, %s23
    %s17 = sphi 0, %s15
    %s18 = sphi 0, %s16
    %s19 = sphi 0, %s17
    %s20 = sphi 0, %s18
    %s30 = sphi 0, %s32
    %s33 = sphi 0, %s30
    %s34 = sphi 0, %s33
    %s50 = sphi 0, %s34
    %s56 = sphi 0, %s58
    %s59 = sphi 0, %s56
    %s60 = sphi 0, %s59
    %s76 = sphi 0, %s60
    %s84 = sphi 0, %s86
    %s87 = sphi 0, %s84
    %s88 = sphi 0, %s87
    %s104 = sphi 0, %s88
  $region4: #{tpu_custom_call.1} parent=0 // loop_header_branch
    %11 = sbr.rel (%p9) target = $region8
  $region5: #{tpu_custom_call.1} parent=0 // loop_body
    %s13 = ssub.s32 %s8, 1
    %s14 = ssub.s32 %s8, 2
    %s21 = sadd.s32 1, %s16
    %p22 = scmp.ge.s32.totalorder %s21, 1
    %s23 = scalar_select %p22, 0, %s21
    %s24 = sadd.s32 1, %s15
    %s25 = scalar_select %p22, %s24, %s15
    %p26 = scmp.ge.s32.totalorder %s25, 2
    %s27 = scalar_select %p26, 0, %s25
    %s28 = ssub.s32 %s15, %s27
    %p29 = scmp.eq.s32.totalorder %s28, 0
    %s31 = sadd.s32 %s30, 1
    %s32 = scalar_select %p29, %s30, %s31
    %p35 = pneg %p29
    %p36 = scmp.eq.s32.totalorder %s8, 1
    %p37 = por %p35, %p36
    %p38 = scmp.ne.s32.totalorder %s30, %s33
    %p39 = scmp.eq.s32.totalorder %s8, 0
    %p40 = por %p38, %p39
    %p41 = scmp.ne.s32.totalorder %s30, %s33
    %p42 = scmp.eq.s32.totalorder %s13, 1
    %p43 = por %p41, %p42
    %p44 = scmp.ne.s32.totalorder %s33, %s34
    %p45 = scmp.eq.s32.totalorder %s13, 0
    %p46 = por %p44, %p45
    %p47 = scmp.ne.s32.totalorder %s33, %s34
    %p48 = scmp.eq.s32.totalorder %s14, 1
    %p49 = por %p47, %p48
    %p51 = scmp.ne.s32.totalorder %s34, %s50
    %p52 = scmp.eq.s32.totalorder %s14, 0
    %p53 = por %p51, %p52
    %s54 = ssub.s32 %s16, %s23
    %p55 = scmp.eq.s32.totalorder %s54, 0
    %s57 = sadd.s32 %s56, 1
    %s58 = scalar_select %p55, %s56, %s57
    %p61 = pneg %p55
    %p62 = scmp.eq.s32.totalorder %s8, 1
    %p63 = por %p61, %p62
    %p64 = scmp.ne.s32.totalorder %s56, %s59
    %p65 = scmp.eq.s32.totalorder %s8, 0
    %p66 = por %p64, %p65
    %p67 = scmp.ne.s32.totalorder %s56, %s59
    %p68 = scmp.eq.s32.totalorder %s13, 1
    %p69 = por %p67, %p68
    %p70 = scmp.ne.s32.totalorder %s59, %s60
    %p71 = scmp.eq.s32.totalorder %s13, 0
    %p72 = por %p70, %p71
    %p73 = scmp.ne.s32.totalorder %s59, %s60
    %p74 = scmp.eq.s32.totalorder %s14, 1
    %p75 = por %p73, %p74
    %p77 = scmp.ne.s32.totalorder %s60, %s76
    %p78 = scmp.eq.s32.totalorder %s14, 0
    %p79 = por %p77, %p78
    %s80 = ssub.s32 %s15, %s27
    %s81 = ssub.s32 %s16, %s23
    %s82 = sor.u32 %s80, %s81
    %p83 = scmp.eq.s32.totalorder %s82, 0
    %s85 = sadd.s32 %s84, 1
    %s86 = scalar_select %p83, %s84, %s85
    %p89 = pneg %p83
    %p90 = scmp.eq.s32.totalorder %s8, 1
    %p91 = por %p89, %p90
    %p92 = scmp.ne.s32.totalorder %s84, %s87
    %p93 = scmp.eq.s32.totalorder %s8, 0
    %p94 = por %p92, %p93
    %p95 = scmp.ne.s32.totalorder %s84, %s87
    %p96 = scmp.eq.s32.totalorder %s13, 1
    %p97 = por %p95, %p96
    %p98 = scmp.ne.s32.totalorder %s87, %s88
    %p99 = scmp.eq.s32.totalorder %s13, 0
    %p100 = por %p98, %p99
    %p101 = scmp.ne.s32.totalorder %s87, %s88
    %p102 = scmp.eq.s32.totalorder %s14, 1
    %p103 = por %p101, %p102
    %p105 = scmp.ne.s32.totalorder %s88, %s104
    %p106 = scmp.eq.s32.totalorder %s14, 0
    %p107 = por %p105, %p106
    %p108 = scmp.le.s32.totalorder 1, %s8
    %p109 = scmp.lt.s32.totalorder %s8, 3
    %p110 = pnand %p108, %p109
    %p111 = pneg %p110
    // Predicated region
    $region9: #{tpu_custom_call.1} parent=5 // pred_check
      _
    $region10: #{tpu_custom_call.1} parent=5 // pred_check_branch
      %113 = sbr.rel (%p110) target = $region12
    $region11: #{tpu_custom_call.1} parent=5 // pred_region
      %s114 = ssub.s32 %s8, 1
      // Predicated region
      $region13: #{tpu_custom_call.1} parent=11 // pred_check
        %p115 = pneg %p72
      $region14: #{tpu_custom_call.1} parent=11 // pred_check_branch
        %117 = sbr.rel (%p115) target = $region16
      $region15: #{tpu_custom_call.1} parent=11 // pred_region
        %p118 = scmp.lt.s32.totalorder %s18, 0
        %s119 = scalar_select %p118, %s18, 0
        %s120 = smul.addr %s119, 4
        %s121 = scalar_lea.vmem %s1, %s120
      $region16: #{tpu_custom_call.1} parent=11 // pred_fallthru
        _
    $region12: #{tpu_custom_call.1} parent=5 // pred_fallthru
      _
    %p122 = scmp.lt.s32.totalorder %s8, 2
    // Predicated region
    $region17: #{tpu_custom_call.1} parent=5 // pred_check
      %p123 = pneg %p122
    $region18: #{tpu_custom_call.1} parent=5 // pred_check_branch
      %125 = sbr.rel (%p123) target = $region20
    $region19: #{tpu_custom_call.1} parent=5 // pred_region
      // Predicated region
      $region21: #{tpu_custom_call.1} parent=19 // pred_check
        %p126 = pneg %p40
      $region22: #{tpu_custom_call.1} parent=19 // pred_check_branch
        %128 = sbr.rel (%p126) target = $region24
      $region23: #{tpu_custom_call.1} parent=19 // pred_region
        %s129 = smul.u32 8, %s15
        %p130 = scmp.lt.s32.totalorder %s129, 15
        %s131 = scalar_select %p130, %s129, 15
        %s132 = smul.addr %s131, 4
        %s133 = scalar_lea.vmem %s0, %s132
        %s134 = smul.u32 8, %s15
      $region24: #{tpu_custom_call.1} parent=19 // pred_fallthru
        _
    $region20: #{tpu_custom_call.1} parent=5 // pred_fallthru
      _
    %p135 = scmp.le.s32.totalorder 1, %s8
    %p136 = scmp.lt.s32.totalorder %s8, 3
    %p137 = pnand %p135, %p136
    %p138 = pneg %p137
    // Predicated region
    $region25: #{tpu_custom_call.1} parent=5 // pred_check
      _
    $region26: #{tpu_custom_call.1} parent=5 // pred_check_branch
      %140 = sbr.rel (%p137) target = $region28
    $region27: #{tpu_custom_call.1} parent=5 // pred_region
      %s141 = ssub.s32 %s8, 1
      %s142 = smul.u32 8, %s17
      %p143 = scmp.lt.s32.totalorder %s142, 15
      %s144 = scalar_select %p143, %s142, 15
      %s145 = smul.addr %s144, 4
      %s146 = scalar_lea.vmem %s0, %s145
      %p147 = pneg %p46
      %p148 = pneg %p43
      %p149 = scmp.lt.s32.totalorder %s18, 0
      %s150 = scalar_select %p149, %s18, 0
      %s151 = smul.addr %s150, 4
      %s152 = scalar_lea.vmem %s1, %s151
      %p153 = pneg %p72
      %p154 = pneg %p69
      %p155 = pneg %p100
      %p156 = pneg %p97
      %s157 = smul.u32 8, %s17
      %p158 = scmp.lt.s32.totalorder %s157, 15
      %s159 = scalar_select %p158, %s157, 15
      %p160 = scmp.lt.s32.totalorder %s18, 0
      %s161 = scalar_select %p160, %s18, 0
      %s162 = sadd.s32 %s161, %s159
      %s163 = smul.addr %s162, 8
      %s164 = scalar_lea.vmem %s2, %s163
      %s165 = smul.u32 8, %s17
      %p166 = scmp.lt.s32.totalorder %s165, 15
      %s167 = scalar_select %p166, %s165, 15
      %s168 = smul.addr %s167, 4
      %s169 = scalar_lea.vmem %s0, %s168
      %s170 = smul.u32 8, %s17
      %p171 = scmp.lt.s32.totalorder %s18, 0
      %s172 = scalar_select %p171, %s18, 0
      %s173 = smul.addr %s172, 4
      %s174 = scalar_lea.vmem %s1, %s173
      %s175 = smul.u32 8, %s17
      %p176 = scmp.lt.s32.totalorder %s175, 15
      %s177 = scalar_select %p176, %s175, 15
      %p178 = scmp.lt.s32.totalorder %s18, 0
      %s179 = scalar_select %p178, %s18, 0
      %s180 = sadd.s32 %s179, %s177
      %s181 = smul.addr %s180, 8
      %s182 = scalar_lea.vmem %s2, %s181
      %s183 = smul.u32 8, %s17
      %v185 = vld [vmem:[%s169] sm:$0xf]
      %v186 = vld [vmem:[%s169 + $0x4] sm:$0xf]
      %v187 = vld [vmem:[%s169 + $0x8] sm:$0xf]
      %v188 = vld [vmem:[%s169 + $0xc] sm:$0xf]
      %v189 = vld [vmem:[%s169 + $0x10] sm:$0xf]
      %v190 = vld [vmem:[%s169 + $0x14] sm:$0xf]
      %v191 = vld [vmem:[%s169 + $0x18] sm:$0xf]
      %v192 = vld [vmem:[%s169 + $0x1c] sm:$0xf]
      %v193 = vld [vmem:[%s174] sm:$0xf]
      %v194 = vld [vmem:[%s174 + $0x4] sm:$0xf]
      %v195 = vld [vmem:[%s174 + $0x8] sm:$0xf]
      %v196 = vld [vmem:[%s174 + $0xc] sm:$0xf]
      %v197 = vld [vmem:[%s174 + $0x10] sm:$0xf]
      %v198 = vld [vmem:[%s174 + $0x14] sm:$0xf]
      %v199 = vld [vmem:[%s174 + $0x18] sm:$0xf]
      %v200 = vld [vmem:[%s174 + $0x1c] sm:$0xf]
      %v209 = vunpack.c.l.b16 %v185
      %v210 = vunpack.c.l.b16 %v186
      %v211 = vunpack.c.l.b16 %v187
      %v212 = vunpack.c.l.b16 %v188
      %v213 = vunpack.c.l.b16 %v189
      %v214 = vunpack.c.l.b16 %v190
      %v215 = vunpack.c.l.b16 %v191
      %v216 = vunpack.c.l.b16 %v192
      %v217 = vpack.c.b16 %v210, %v209
      %v218 = vpack.c.b16 %v212, %v211
      %v219 = vpack.c.b16 %v214, %v213
      %v220 = vpack.c.b16 %v216, %v215
      %v229 = vunpack.c.l.b16 %v193
      %v230 = vunpack.c.l.b16 %v194
      %v231 = vunpack.c.l.b16 %v195
      %v232 = vunpack.c.l.b16 %v196
      %v233 = vunpack.c.l.b16 %v197
      %v234 = vunpack.c.l.b16 %v198
      %v235 = vunpack.c.l.b16 %v199
      %v236 = vunpack.c.l.b16 %v200
      %v237 = vpack.c.b16 %v230, %v229
      %v238 = vpack.c.b16 %v232, %v231
      %v239 = vpack.c.b16 %v234, %v233
      %v240 = vpack.c.b16 %v236, %v235
      %vm245 = vcmask 523264
      %v247 = vsel %vm245, %v217, 0
      %v250 = vsel %vm245, %v218, 0
      %v253 = vsel %vm245, %v219, 0
      %v256 = vsel %vm245, %v220, 0
      %258 = vmatprep.subr.bf16.mxu0 0
      %259 = vmatpush1.bf16.msra.mxu0 %v237
      %260 = vmatprep.subr.bf16.mxu0 0
      %261 = vmatpush1.bf16.msra.mxu0 %v238
      %262 = vmatprep.subr.bf16.mxu0 0
      %263 = vmatpush1.bf16.msra.mxu0 %v239
      %264 = vmatprep.subr.bf16.mxu0 0
      %265 = vmatpush1.bf16.msra.mxu0 %v240
      %266 = vmatprep.subr.bf16.mxu0 0
      %267 = vmatpush1.bf16.msra.mxu0 0
      %268 = vmatprep.subr.bf16.mxu0 0
      %269 = vmatpush1.bf16.msra.mxu0 0
      %270 = vmatprep.subr.bf16.mxu0 0
      %271 = vmatpush1.bf16.msra.mxu0 0
      %272 = vmatprep.subr.bf16.mxu0 0
      %273 = vmatpush1.bf16.msra.mxu0 0
      %274 = vmatprep.subr.bf16.mxu0 0
      %275 = vmatpush1.bf16.msra.mxu0 0
      %276 = vmatprep.subr.bf16.mxu0 0
      %277 = vmatpush1.bf16.msra.mxu0 0
      %278 = vmatprep.subr.bf16.mxu0 0
      %279 = vmatpush1.bf16.msra.mxu0 0
      %280 = vmatprep.subr.bf16.mxu0 0
      %281 = vmatpush1.bf16.msra.mxu0 0
      %282 = vmatprep.subr.bf16.mxu0 0
      %283 = vmatpush1.bf16.msra.mxu0 0
      %284 = vmatprep.subr.bf16.mxu0 0
      %285 = vmatpush1.bf16.msra.mxu0 0
      %286 = vmatprep.subr.bf16.mxu0 0
      %287 = vmatpush1.bf16.msra.mxu0 0
      %288 = vmatprep.subr.bf16.mxu0 0
      %289 = vmatpush1.bf16.msra.mxu0 0
      %290 = vmatprep.mubr.bf16.mxu0 0
      %291 = vmatmul.mubr.bf16.gmra.mrb[0].mxu0 %v247
      %v292 = vpop.f32.mrb[0].mxu0
      %v293 = vadd.f32 0.0, %v292
      %v294 = vpop.f32.mrb[0].mxu0
      %v295 = vpop.f32.mrb[0].mxu0
      %v296 = vadd.f32 0.0, %v295
      %v297 = vpop.f32.mrb[0].mxu0
      %298 = vmatprep.mubr.bf16.mxu0 0
      %299 = vmatmul.mubr.bf16.gmra.mrb[0].mxu0 %v250
      %v300 = vpop.f32.mrb[0].mxu0
      %v301 = vadd.f32 0.0, %v300
      %v302 = vpop.f32.mrb[0].mxu0
      %v303 = vpop.f32.mrb[0].mxu0
      %v304 = vadd.f32 0.0, %v303
      %v305 = vpop.f32.mrb[0].mxu0
      %306 = vmatprep.mubr.bf16.mxu0 0
      %307 = vmatmul.mubr.bf16.gmra.mrb[0].mxu0 %v253
      %v308 = vpop.f32.mrb[0].mxu0
      %v309 = vadd.f32 0.0, %v308
      %v310 = vpop.f32.mrb[0].mxu0
      %v311 = vpop.f32.mrb[0].mxu0
      %v312 = vadd.f32 0.0, %v311
      %v313 = vpop.f32.mrb[0].mxu0
      %314 = vmatprep.mubr.bf16.mxu0 0
      %315 = vmatmul.mubr.bf16.gmra.mrb[0].mxu0 %v256
      %v316 = vpop.f32.mrb[0].mxu0
      %v317 = vadd.f32 0.0, %v316
      %v318 = vpop.f32.mrb[0].mxu0
      %v319 = vpop.f32.mrb[0].mxu0
      %v320 = vadd.f32 0.0, %v319
      %v321 = vpop.f32.mrb[0].mxu0
      %322 = vdwg.mxu0
      %vm323 = vcmask 261120
      %324 = vst.msk [vmem:[%s182] sm:$0xff] %vm323, %v293
      %325 = vst.msk [vmem:[%s182 + $0x8] sm:$0xff] %vm323, %v296
      %326 = vst.msk [vmem:[%s182 + $0x10] sm:$0xff] %vm323, %v301
      %327 = vst.msk [vmem:[%s182 + $0x18] sm:$0xff] %vm323, %v304
      %328 = vst.msk [vmem:[%s182 + $0x20] sm:$0xff] %vm323, %v309
      %329 = vst.msk [vmem:[%s182 + $0x28] sm:$0xff] %vm323, %v312
      %330 = vst.msk [vmem:[%s182 + $0x30] sm:$0xff] %vm323, %v317
      %331 = vst.msk [vmem:[%s182 + $0x38] sm:$0xff] %vm323, %v320
      %s332 = smul.u32 8, %s17
      %p333 = scmp.lt.s32.totalorder %s332, 15
      %s334 = scalar_select %p333, %s332, 15
      %p335 = scmp.lt.s32.totalorder %s18, 0
      %s336 = scalar_select %p335, %s18, 0
      %s337 = sadd.s32 %s336, %s334
      %s338 = smul.addr %s337, 8
      %s339 = scalar_lea.vmem %s2, %s338
      // Predicated region
      $region29: #{tpu_custom_call.1} parent=27 // pred_check
        %p340 = pneg %p97
      $region30: #{tpu_custom_call.1} parent=27 // pred_check_branch
        %342 = sbr.rel (%p340) target = $region32
      $region31: #{tpu_custom_call.1} parent=27 // pred_region
        %s343 = smul.u32 8, %s17
      $region32: #{tpu_custom_call.1} parent=27 // pred_fallthru
        _
    $region28: #{tpu_custom_call.1} parent=5 // pred_fallthru
      _
    %p344 = scmp.le.s32.totalorder 2, %s8
    // Predicated region
    $region33: #{tpu_custom_call.1} parent=5 // pred_check
      %p345 = pneg %p344
    $region34: #{tpu_custom_call.1} parent=5 // pred_check_branch
      %347 = sbr.rel (%p345) target = $region36
    $region35: #{tpu_custom_call.1} parent=5 // pred_region
      %s348 = ssub.s32 %s8, 2
      // Predicated region
      $region37: #{tpu_custom_call.1} parent=35 // pred_check
        %p349 = pneg %p103
      $region38: #{tpu_custom_call.1} parent=35 // pred_check_branch
        %351 = sbr.rel (%p349) target = $region40
      $region39: #{tpu_custom_call.1} parent=35 // pred_region
        %s352 = smul.u32 8, %s19
        %p353 = scmp.lt.s32.totalorder %s352, 15
        %s354 = scalar_select %p353, %s352, 15
        %p355 = scmp.lt.s32.totalorder %s20, 0
        %s356 = scalar_select %p355, %s20, 0
        %s357 = sadd.s32 %s356, %s354
        %s358 = smul.addr %s357, 8
        %s359 = scalar_lea.vmem %s2, %s358
      $region40: #{tpu_custom_call.1} parent=35 // pred_fallthru
        _
    $region36: #{tpu_custom_call.1} parent=5 // pred_fallthru
      _
  $region6: #{tpu_custom_call.1} parent=0 // loop_footer
    %s12 = sadd.s32 1, %s8
  $region7: #{tpu_custom_call.1} parent=0 // loop_footer_branch
    %7 = sbr.rel target = $region3
  $region8: #{tpu_custom_call.1} parent=0 // loop_exit
    _

</llo_original>
